<compile_context>
chip_gen: v5e
topology: v5e:2x2
jax: 0.10.0
libtpu: 0.0.40
codegen_flags: <defaults>
</compile_context>

<pallas_src>
import jax
import jax.numpy as jnp
from jax.experimental import pallas as pl
from jax.experimental.pallas import tpu as pltpu


def _round_up(n: int, m: int) -> int:
    return ((n + m - 1) // m) * m


def encoder_kernel(x_ref, w1_ref, b1_ref, w2_ref, b2_ref, o_ref):
    # Layer 1: cast the streamed f32 x tile to bf16 *inside* the kernel
    # (no extra HBM pass), bf16 x bf16 on the MXU with f32 accumulation.
    x = x_ref[...].astype(jnp.bfloat16)
    h = jnp.dot(x, w1_ref[...], preferred_element_type=jnp.float32)
    h = jnp.maximum(h + b1_ref[...], 0.0)          # bias + ReLU in f32
    # Layer 2: tiny (64 x 8 padded) matmul, bf16 operands, f32 accumulate.
    out = jnp.dot(h.astype(jnp.bfloat16), w2_ref[...],
                  preferred_element_type=jnp.float32)
    o_ref[...] = (out + b2_ref[...]).astype(o_ref.dtype)


def encoder_forward(x, w1, b1, w2, b2, *, tile_b: int = 1024):
    """x: (B, 784) f32; w1: (784, 64); b1: (64,); w2: (64, 3); b2: (3,)."""
    B, D_in = x.shape
    D_hid = w1.shape[1]
    D_out = w2.shape[1]
    D_out_pad = 8   # pad 3 -> 8 output columns; last block dim == full array dim

    x = x.astype(jnp.float32)                       # no standalone bf16 convert pass
    w1b = w1.astype(jnp.bfloat16)
    b1f = b1.reshape(1, D_hid).astype(jnp.float32)
    w2p = jnp.zeros((D_hid, D_out_pad), jnp.bfloat16).at[:, :D_out].set(
        w2.astype(jnp.bfloat16))
    b2p = jnp.zeros((1, D_out_pad), jnp.float32).at[:, :D_out].set(
        b2.reshape(1, D_out).astype(jnp.float32))

    # Tile selection: as large as possible (amortize ~0.35 us/step overhead)
    # while keeping >= 2 grid steps for larger batches (v7x has 2 TensorCores).
    tb = min(tile_b, _round_up(pl.cdiv(B, 2), 8))
    if tb >= B:
        tb = B                                       # single block == full array dim
    grid = (pl.cdiv(B, tb),)                         # ragged last block is masked

    flops = 2 * B * (D_in * D_hid + D_hid * D_out_pad)
    bytes_accessed = (B * D_in * 4                   # x (f32, read once)
                      + D_in * D_hid * 2             # w1 (bf16)
                      + D_hid * D_out_pad * 2        # w2 (bf16, padded)
                      + D_hid * 4 + D_out_pad * 4    # biases
                      + B * D_out_pad * 4)           # out (f32, 8 cols)

    out = pl.pallas_call(
        encoder_kernel,
        out_shape=jax.ShapeDtypeStruct((B, D_out_pad), jnp.float32),
        grid=grid,
        in_specs=[
            # x: streamed per batch tile (double-buffered by the pipeline).
            pl.BlockSpec((tb, D_in), lambda i: (i, 0)),
            # Weights / biases: same block every step -> resident in VMEM.
            pl.BlockSpec((D_in, D_hid), lambda i: (0, 0)),
            pl.BlockSpec((1, D_hid), lambda i: (0, 0)),
            pl.BlockSpec((D_hid, D_out_pad), lambda i: (0, 0)),
            pl.BlockSpec((1, D_out_pad), lambda i: (0, 0)),
        ],
        out_specs=pl.BlockSpec((tb, D_out_pad), lambda i: (i, 0)),
        compiler_params=pltpu.CompilerParams(
            dimension_semantics=("parallel",)),
        cost_estimate=pl.CostEstimate(
            flops=flops, transcendentals=0, bytes_accessed=bytes_accessed),
    )(x, w1b, b1f, w2p, b2p)

    return out[:, :D_out]


def init_params(key):
    # Shapes matching PyTorch Linear(784,64) and Linear(64,3), stored (in, out).
    k1, k2, k3, k4 = jax.random.split(key, 4)
    bound1 = 1.0 / (28 * 28) ** 0.5
    bound2 = 1.0 / 64 ** 0.5
    w1 = jax.random.uniform(k1, (28 * 28, 64), jnp.float32, -bound1, bound1)
    b1 = jax.random.uniform(k2, (64,), jnp.float32, -bound1, bound1)
    w2 = jax.random.uniform(k3, (64, 3), jnp.float32, -bound2, bound2)
    b2 = jax.random.uniform(k4, (3,), jnp.float32, -bound2, bound2)
    return w1, b1, w2, b2


def _reference(x, w1, b1, w2, b2):
    # Reference with the same bf16 rounding of matmul operands as the kernel.
    xb = x.astype(jnp.bfloat16).astype(jnp.float32)
    w1b = w1.astype(jnp.bfloat16).astype(jnp.float32)
    h = jnp.maximum(xb @ w1b + b1.reshape(1, -1), 0.0)
    hb = h.astype(jnp.bfloat16).astype(jnp.float32)
    w2b = w2.astype(jnp.bfloat16).astype(jnp.float32)
    return hb @ w2b + b2.reshape(1, -1)


if __name__ == "__main__":
    key = jax.random.PRNGKey(0)
    k_x, k_x2, k_p = jax.random.split(key, 3)
    w1, b1, w2, b2 = init_params(k_p)

    # Case 1: small tile-aligned batch -> tb=8, grid=2 (pipelined, parallel axis).
    B = 16
    x = jax.random.normal(k_x, (B, 28 * 28), jnp.float32)
    out = encoder_forward(x, w1, b1, w2, b2)
    jax.block_until_ready(out)
    ref = _reference(x, w1, b1, w2, b2)
    assert out.shape == (B, 3), out.shape
    assert jnp.allclose(out, ref, atol=2e-2, rtol=2e-2), "mismatch (B=16)"

    # Case 2: ragged batch (tb does not divide B) -> masked last block, no pad copy.
    B2 = 20
    x2 = jax.random.normal(k_x2, (B2, 28 * 28), jnp.float32)
    out2 = encoder_forward(x2, w1, b1, w2, b2)
    jax.block_until_ready(out2)
    ref2 = _reference(x2, w1, b1, w2, b2)
    assert out2.shape == (B2, 3), out2.shape
    assert jnp.allclose(out2, ref2, atol=2e-2, rtol=2e-2), "mismatch (B=20)"

    print("KERNEL_OK")
</pallas_src>

<mosaic_0001>
module attributes {stable_mosaic.version = 11 : i64} {
  func.func @encoder_kernel(%arg0: i32, %arg1: memref<8x784xf32, #tpu.memory_space<vmem>>, %arg2: memref<784x64xbf16, #tpu.memory_space<vmem>>, %arg3: memref<1x64xf32, #tpu.memory_space<vmem>>, %arg4: memref<64x8xbf16, #tpu.memory_space<vmem>>, %arg5: memref<1x8xf32, #tpu.memory_space<vmem>>, %arg6: memref<8x8xf32, #tpu.memory_space<vmem>>) attributes {dimension_semantics = [#tpu.dimension_semantics<parallel>], iteration_bounds = array<i64: 2>, scalar_prefetch = 0 : i64, scratch_operands = 0 : i64, tpu.core_type = #tpu.core_type<tc>, window_params = [{transform_indices = @transform_0, window_bounds = array<i64: 8, 784>}, {pipeline_mode = #tpu.pipeline_mode<synchronous>, transform_indices = @transform_1, window_bounds = array<i64: 784, 64>}, {pipeline_mode = #tpu.pipeline_mode<synchronous>, transform_indices = @transform_2, window_bounds = array<i64: 1, 64>}, {pipeline_mode = #tpu.pipeline_mode<synchronous>, transform_indices = @transform_3, window_bounds = array<i64: 64, 8>}, {pipeline_mode = #tpu.pipeline_mode<synchronous>, transform_indices = @transform_4, window_bounds = array<i64: 1, 8>}, {transform_indices = @transform_5, window_bounds = array<i64: 8, 8>}]} {
    %c0 = arith.constant 0 : index
    %c0_0 = arith.constant 0 : index
    %0 = vector.load %arg1[%c0, %c0_0] : memref<8x784xf32, #tpu.memory_space<vmem>>, vector<8x784xf32>
    %1 = arith.truncf %0 : vector<8x784xf32> to vector<8x784xbf16>
    %c0_1 = arith.constant 0 : index
    %c0_2 = arith.constant 0 : index
    %2 = vector.load %arg2[%c0_1, %c0_2] : memref<784x64xbf16, #tpu.memory_space<vmem>>, vector<784x64xbf16>
    %cst = arith.constant dense<0.000000e+00> : vector<8x64xf32>
    %3 = tpu.matmul %1, %2, %cst {dimension_numbers = #tpu.dot_dimension_numbers<[1], [0], [0], [1], [0, 0, 1, 1], [], []>} : vector<8x784xbf16>, vector<784x64xbf16>, vector<8x64xf32> -> vector<8x64xf32>
    %c0_3 = arith.constant 0 : index
    %c0_4 = arith.constant 0 : index
    %4 = vector.load %arg3[%c0_3, %c0_4] : memref<1x64xf32, #tpu.memory_space<vmem>>, vector<1x64xf32>
    %5 = vector.broadcast %4 : vector<1x64xf32> to vector<8x64xf32>
    %6 = arith.addf %3, %5 : vector<8x64xf32>
    %cst_5 = arith.constant 0.000000e+00 : f32
    %7 = vector.broadcast %cst_5 : f32 to vector<8x64xf32>
    %8 = arith.maximumf %6, %7 : vector<8x64xf32>
    %9 = arith.truncf %8 : vector<8x64xf32> to vector<8x64xbf16>
    %c0_6 = arith.constant 0 : index
    %c0_7 = arith.constant 0 : index
    %10 = vector.load %arg4[%c0_6, %c0_7] : memref<64x8xbf16, #tpu.memory_space<vmem>>, vector<64x8xbf16>
    %cst_8 = arith.constant dense<0.000000e+00> : vector<8x8xf32>
    %11 = tpu.matmul %9, %10, %cst_8 {dimension_numbers = #tpu.dot_dimension_numbers<[1], [0], [0], [1], [0, 0, 1, 1], [], []>} : vector<8x64xbf16>, vector<64x8xbf16>, vector<8x8xf32> -> vector<8x8xf32>
    %c0_9 = arith.constant 0 : index
    %c0_10 = arith.constant 0 : index
    %12 = vector.load %arg5[%c0_9, %c0_10] : memref<1x8xf32, #tpu.memory_space<vmem>>, vector<1x8xf32>
    %13 = vector.broadcast %12 : vector<1x8xf32> to vector<8x8xf32>
    %14 = arith.addf %11, %13 : vector<8x8xf32>
    %c0_11 = arith.constant 0 : index
    %c0_12 = arith.constant 0 : index
    %15 = vector.load %arg6[%c0_11, %c0_12] : memref<8x8xf32, #tpu.memory_space<vmem>>, vector<8x8xf32>
    tpu.vector_store %arg6[%c0_11, %c0_12], %14 {strides = array<i32>} : memref<8x8xf32, #tpu.memory_space<vmem>>, vector<8x8xf32>,
    return
  }
  func.func @transform_0(%arg0: i32) -> (i32, i32) {
    %c0_i32 = arith.constant 0 : i32
    %c0_i32_0 = arith.constant 0 : i32
    return %arg0, %c0_i32 : i32, i32
  }
  func.func @transform_1(%arg0: i32) -> (i32, i32) {
    %c0_i32 = arith.constant 0 : i32
    %c0_i32_0 = arith.constant 0 : i32
    %c0_i32_1 = arith.constant 0 : i32
    return %c0_i32, %c0_i32_0 : i32, i32
  }
  func.func @transform_2(%arg0: i32) -> (i32, i32) {
    %c0_i32 = arith.constant 0 : i32
    %c0_i32_0 = arith.constant 0 : i32
    %c0_i32_1 = arith.constant 0 : i32
    return %c0_i32, %c0_i32_0 : i32, i32
  }
  func.func @transform_3(%arg0: i32) -> (i32, i32) {
    %c0_i32 = arith.constant 0 : i32
    %c0_i32_0 = arith.constant 0 : i32
    %c0_i32_1 = arith.constant 0 : i32
    return %c0_i32, %c0_i32_0 : i32, i32
  }
  func.func @transform_4(%arg0: i32) -> (i32, i32) {
    %c0_i32 = arith.constant 0 : i32
    %c0_i32_0 = arith.constant 0 : i32
    %c0_i32_1 = arith.constant 0 : i32
    return %c0_i32, %c0_i32_0 : i32, i32
  }
  func.func @transform_5(%arg0: i32) -> (i32, i32) {
    %c0_i32 = arith.constant 0 : i32
    %c0_i32_0 = arith.constant 0 : i32
    return %arg0, %c0_i32 : i32, i32
  }
}

</mosaic_0001>

<llo_original>
// kernel: tpu_custom_call.1
$region0: #{tpu_custom_call.1}
  #allocation0 [shape = 'u32[]', space=smem, size = 0x4, offset = 0x4, fixed_abs, tag = 'smem constant byte address 0x4 - core index']
  #allocation1 [shape = 'u32[72,128]{1,0:T(1,128)}', space=vmem, size = 0x9000, scoped, tag = 'internal scratch']
  %s0 = inlined_call_operand.vmem [shape: f32[16,784], index: 0, kind: input, shape index: {}]
  %s1 = inlined_call_operand.vmem [shape: bf16[784,64], index: 1, kind: input, shape index: {}]
  %s2 = inlined_call_operand.vmem [shape: f32[1,64], index: 2, kind: input, shape index: {}]
  %s3 = inlined_call_operand.vmem [shape: bf16[64,8], index: 3, kind: input, shape index: {}]
  %s4 = inlined_call_operand.vmem [shape: f32[1,8], index: 4, kind: input, shape index: {}]
  %s5 = inlined_call_operand.vmem [shape: f32[16,8], index: 5, kind: output, shape index: {}]
  %s6 = sld [smem:[#allocation0]]
  $region53: #{tpu_custom_call.1} parent=0
    _
  %s8 = ssub.s32 1, %s6
  %s9 = scalar_select 0, %s8, %s6
  loop: start=0, step=1, limit=4
  $region2: #{tpu_custom_call.1} parent=0 // loop_pre_header
    _
  $region3: #{tpu_custom_call.1} parent=0 // loop_header
    %s11 = sphi 0, %s15
    %p12 = scmp.ge.s32.totalorder %s11, 4
    %s21 = sphi 0, %s23
    %s24 = sphi 0, %s21
    %s25 = sphi 0, %s24
    %s41 = sphi 0, %s25
    %s45 = sphi 0, %s45
    %s47 = sphi 0, %s45
    %s48 = sphi 0, %s47
    %s62 = sphi 0, %s48
    %s66 = sphi 0, %s66
    %s68 = sphi 0, %s66
    %s69 = sphi 0, %s68
    %s83 = sphi 0, %s69
    %s87 = sphi 0, %s87
    %s89 = sphi 0, %s87
    %s90 = sphi 0, %s89
    %s104 = sphi 0, %s90
    %s108 = sphi 0, %s108
    %s110 = sphi 0, %s108
    %s111 = sphi 0, %s110
    %s125 = sphi 0, %s111
    %s131 = sphi 0, %s133
    %s134 = sphi 0, %s131
    %s135 = sphi 0, %s134
    %s151 = sphi 0, %s135
  $region4: #{tpu_custom_call.1} parent=0 // loop_header_branch
    %14 = sbr.rel (%p12) target = $region8
  $region5: #{tpu_custom_call.1} parent=0 // loop_body
    %s16 = ssub.s32 %s11, 1
    %s17 = ssub.s32 %s11, 2
    %s18 = sadd.s32 %s11, 1
    %s19 = ssub.s32 %s11, %s18
    %p20 = scmp.eq.s32.totalorder %s19, 0
    %s22 = sadd.s32 %s21, 1
    %s23 = scalar_select %p20, %s21, %s22
    %p26 = pneg %p20
    %p27 = scmp.eq.s32.totalorder %s11, 1
    %p28 = por %p26, %p27
    %p29 = scmp.ne.s32.totalorder %s21, %s24
    %p30 = scmp.eq.s32.totalorder %s11, 0
    %p31 = por %p29, %p30
    %p32 = scmp.ne.s32.totalorder %s21, %s24
    %p33 = scmp.eq.s32.totalorder %s16, 1
    %p34 = por %p32, %p33
    %p35 = scmp.ne.s32.totalorder %s24, %s25
    %p36 = scmp.eq.s32.totalorder %s16, 0
    %p37 = por %p35, %p36
    %p38 = scmp.ne.s32.totalorder %s24, %s25
    %p39 = scmp.eq.s32.totalorder %s17, 1
    %p40 = por %p38, %p39
    %p42 = scmp.ne.s32.totalorder %s25, %s41
    %p43 = scmp.eq.s32.totalorder %s17, 0
    %p44 = por %p42, %p43
    %s46 = sadd.s32 %s45, 1
    %p49 = scmp.eq.s32.totalorder %s11, 1
    %p50 = scmp.ne.s32.totalorder %s45, %s47
    %p51 = scmp.eq.s32.totalorder %s11, 0
    %p52 = por %p50, %p51
    %p53 = scmp.ne.s32.totalorder %s45, %s47
    %p54 = scmp.eq.s32.totalorder %s16, 1
    %p55 = por %p53, %p54
    %p56 = scmp.ne.s32.totalorder %s47, %s48
    %p57 = scmp.eq.s32.totalorder %s16, 0
    %p58 = por %p56, %p57
    %p59 = scmp.ne.s32.totalorder %s47, %s48
    %p60 = scmp.eq.s32.totalorder %s17, 1
    %p61 = por %p59, %p60
    %p63 = scmp.ne.s32.totalorder %s48, %s62
    %p64 = scmp.eq.s32.totalorder %s17, 0
    %p65 = por %p63, %p64
    %s67 = sadd.s32 %s66, 1
    %p70 = scmp.eq.s32.totalorder %s11, 1
    %p71 = scmp.ne.s32.totalorder %s66, %s68
    %p72 = scmp.eq.s32.totalorder %s11, 0
    %p73 = por %p71, %p72
    %p74 = scmp.ne.s32.totalorder %s66, %s68
    %p75 = scmp.eq.s32.totalorder %s16, 1
    %p76 = por %p74, %p75
    %p77 = scmp.ne.s32.totalorder %s68, %s69
    %p78 = scmp.eq.s32.totalorder %s16, 0
    %p79 = por %p77, %p78
    %p80 = scmp.ne.s32.totalorder %s68, %s69
    %p81 = scmp.eq.s32.totalorder %s17, 1
    %p82 = por %p80, %p81
    %p84 = scmp.ne.s32.totalorder %s69, %s83
    %p85 = scmp.eq.s32.totalorder %s17, 0
    %p86 = por %p84, %p85
    %s88 = sadd.s32 %s87, 1
    %p91 = scmp.eq.s32.totalorder %s11, 1
    %p92 = scmp.ne.s32.totalorder %s87, %s89
    %p93 = scmp.eq.s32.totalorder %s11, 0
    %p94 = por %p92, %p93
    %p95 = scmp.ne.s32.totalorder %s87, %s89
    %p96 = scmp.eq.s32.totalorder %s16, 1
    %p97 = por %p95, %p96
    %p98 = scmp.ne.s32.totalorder %s89, %s90
    %p99 = scmp.eq.s32.totalorder %s16, 0
    %p100 = por %p98, %p99
    %p101 = scmp.ne.s32.totalorder %s89, %s90
    %p102 = scmp.eq.s32.totalorder %s17, 1
    %p103 = por %p101, %p102
    %p105 = scmp.ne.s32.totalorder %s90, %s104
    %p106 = scmp.eq.s32.totalorder %s17, 0
    %p107 = por %p105, %p106
    %s109 = sadd.s32 %s108, 1
    %p112 = scmp.eq.s32.totalorder %s11, 1
    %p113 = scmp.ne.s32.totalorder %s108, %s110
    %p114 = scmp.eq.s32.totalorder %s11, 0
    %p115 = por %p113, %p114
    %p116 = scmp.ne.s32.totalorder %s108, %s110
    %p117 = scmp.eq.s32.totalorder %s16, 1
    %p118 = por %p116, %p117
    %p119 = scmp.ne.s32.totalorder %s110, %s111
    %p120 = scmp.eq.s32.totalorder %s16, 0
    %p121 = por %p119, %p120
    %p122 = scmp.ne.s32.totalorder %s110, %s111
    %p123 = scmp.eq.s32.totalorder %s17, 1
    %p124 = por %p122, %p123
    %p126 = scmp.ne.s32.totalorder %s111, %s125
    %p127 = scmp.eq.s32.totalorder %s17, 0
    %p128 = por %p126, %p127
    %s129 = ssub.s32 %s11, %s18
    %p130 = scmp.eq.s32.totalorder %s129, 0
    %s132 = sadd.s32 %s131, 1
    %s133 = scalar_select %p130, %s131, %s132
    %p136 = pneg %p130
    %p137 = scmp.eq.s32.totalorder %s11, 1
    %p138 = por %p136, %p137
    %p139 = scmp.ne.s32.totalorder %s131, %s134
    %p140 = scmp.eq.s32.totalorder %s11, 0
    %p141 = por %p139, %p140
    %p142 = scmp.ne.s32.totalorder %s131, %s134
    %p143 = scmp.eq.s32.totalorder %s16, 1
    %p144 = por %p142, %p143
    %p145 = scmp.ne.s32.totalorder %s134, %s135
    %p146 = scmp.eq.s32.totalorder %s16, 0
    %p147 = por %p145, %p146
    %p148 = scmp.ne.s32.totalorder %s134, %s135
    %p149 = scmp.eq.s32.totalorder %s17, 1
    %p150 = por %p148, %p149
    %p152 = scmp.ne.s32.totalorder %s135, %s151
    %p153 = scmp.eq.s32.totalorder %s17, 0
    %p154 = por %p152, %p153
    %p155 = scmp.le.s32.totalorder 1, %s11
    %p156 = scmp.lt.s32.totalorder %s11, 3
    %p157 = pnand %p155, %p156
    %p158 = pneg %p157
    // Predicated region
    $region9: #{tpu_custom_call.1} parent=5 // pred_check
      _
    $region10: #{tpu_custom_call.1} parent=5 // pred_check_branch
      %160 = sbr.rel (%p157) target = $region12
    $region11: #{tpu_custom_call.1} parent=5 // pred_region
      %s161 = ssub.s32 %s11, 1
      // Predicated region
      $region13: #{tpu_custom_call.1} parent=11 // pred_check
        %p162 = pneg %p58
      $region14: #{tpu_custom_call.1} parent=11 // pred_check_branch
        %164 = sbr.rel (%p162) target = $region16
      $region15: #{tpu_custom_call.1} parent=11 // pred_region
        _
      $region16: #{tpu_custom_call.1} parent=11 // pred_fallthru
        _
      // Predicated region
      $region17: #{tpu_custom_call.1} parent=11 // pred_check
        %p165 = pneg %p79
      $region18: #{tpu_custom_call.1} parent=11 // pred_check_branch
        %167 = sbr.rel (%p165) target = $region20
      $region19: #{tpu_custom_call.1} parent=11 // pred_region
        _
      $region20: #{tpu_custom_call.1} parent=11 // pred_fallthru
        _
      // Predicated region
      $region21: #{tpu_custom_call.1} parent=11 // pred_check
        %p168 = pneg %p100
      $region22: #{tpu_custom_call.1} parent=11 // pred_check_branch
        %170 = sbr.rel (%p168) target = $region24
      $region23: #{tpu_custom_call.1} parent=11 // pred_region
        _
      $region24: #{tpu_custom_call.1} parent=11 // pred_fallthru
        _
      // Predicated region
      $region25: #{tpu_custom_call.1} parent=11 // pred_check
        %p171 = pneg %p121
      $region26: #{tpu_custom_call.1} parent=11 // pred_check_branch
        %173 = sbr.rel (%p171) target = $region28
      $region27: #{tpu_custom_call.1} parent=11 // pred_region
        _
      $region28: #{tpu_custom_call.1} parent=11 // pred_fallthru
        _
    $region12: #{tpu_custom_call.1} parent=5 // pred_fallthru
      _
    %p174 = scmp.lt.s32.totalorder %s11, 2
    // Predicated region
    $region29: #{tpu_custom_call.1} parent=5 // pred_check
      %p175 = pneg %p174
    $region30: #{tpu_custom_call.1} parent=5 // pred_check_branch
      %177 = sbr.rel (%p175) target = $region32
    $region31: #{tpu_custom_call.1} parent=5 // pred_region
      // Predicated region
      $region33: #{tpu_custom_call.1} parent=31 // pred_check
        %p178 = pneg %p31
      $region34: #{tpu_custom_call.1} parent=31 // pred_check_branch
        %180 = sbr.rel (%p178) target = $region36
      $region35: #{tpu_custom_call.1} parent=31 // pred_region
        %p181 = scmp.lt.s32.totalorder %s11, 1
        %s182 = scalar_select %p181, %s11, 1
        %s183 = smul.addr %s182, 7
        %s184 = smul.addr %s183, 8
        %s185 = scalar_lea.vmem %s0, %s184
      $region36: #{tpu_custom_call.1} parent=31 // pred_fallthru
        _
    $region32: #{tpu_custom_call.1} parent=5 // pred_fallthru
      _
    %p186 = scmp.le.s32.totalorder 1, %s11
    %p187 = scmp.lt.s32.totalorder %s11, 3
    %p188 = pnand %p186, %p187
    %p189 = pneg %p188
    // Predicated region
    $region37: #{tpu_custom_call.1} parent=5 // pred_check
      _
    $region38: #{tpu_custom_call.1} parent=5 // pred_check_branch
      %191 = sbr.rel (%p188) target = $region40
    $region39: #{tpu_custom_call.1} parent=5 // pred_region
      %s192 = ssub.s32 %s11, 1
      %p193 = scmp.lt.s32.totalorder %s16, 1
      %s194 = scalar_select %p193, %s16, 1
      %s195 = smul.addr %s194, 7
      %s196 = smul.addr %s195, 8
      %s197 = scalar_lea.vmem %s0, %s196
      %p198 = pneg %p37
      %p199 = pneg %p34
      %p200 = pneg %p58
      %p201 = pneg %p55
      %p202 = pneg %p79
      %p203 = pneg %p76
      %p204 = pneg %p100
      %p205 = pneg %p97
      %p206 = pneg %p121
      %p207 = pneg %p118
      %p208 = pneg %p147
      %p209 = pneg %p144
      %p210 = scmp.lt.s32.totalorder %s16, 1
      %s211 = scalar_select %p210, %s16, 1
      %s212 = smul.addr %s211, 8
      %s213 = scalar_lea.vmem %s5, %s212
      %p214 = scmp.lt.s32.totalorder %s16, 1
      %s215 = scalar_select %p214, %s16, 1
      %s216 = smul.addr %s215, 7
      %s217 = smul.addr %s216, 8
      %s218 = scalar_lea.vmem %s0, %s217
      %p219 = scmp.lt.s32.totalorder %s16, 1
      %s220 = scalar_select %p219, %s16, 1
      %s221 = smul.addr %s220, 8
      %s222 = scalar_lea.vmem %s5, %s221
      %v224 = vld [vmem:[%s218] sm:$0xff]
      %v225 = vld [vmem:[%s218 + $0x8] sm:$0xff]
      %v226 = vld [vmem:[%s218 + $0x10] sm:$0xff]
      %v227 = vld [vmem:[%s218 + $0x18] sm:$0xff]
      %v228 = vld [vmem:[%s218 + $0x20] sm:$0xff]
      %v229 = vld [vmem:[%s218 + $0x28] sm:$0xff]
      %v230 = vld [vmem:[%s218 + $0x30] sm:$0xff]
      %v231 = vpack.c.bf16 %v224, %v224
      %v232 = vpack.c.bf16 %v225, %v225
      %v233 = vpack.c.bf16 %v226, %v226
      %v234 = vpack.c.bf16 %v227, %v227
      %v235 = vpack.c.bf16 %v228, %v228
      %v236 = vpack.c.bf16 %v229, %v229
      %v237 = vpack.c.bf16 %v230, %v230
      %v238 = vld [vmem:[%s1] sm:$0xf]
      %v239 = vld [vmem:[%s1 + $0x4] sm:$0xf]
      %v240 = vld [vmem:[%s1 + $0x8] sm:$0xf]
      %v241 = vld [vmem:[%s1 + $0xc] sm:$0xf]
      %v242 = vld [vmem:[%s1 + $0x10] sm:$0xf]
      %v243 = vld [vmem:[%s1 + $0x14] sm:$0xf]
      %v244 = vld [vmem:[%s1 + $0x18] sm:$0xf]
      %v245 = vld [vmem:[%s1 + $0x1c] sm:$0xf]
      %v246 = vld [vmem:[%s1 + $0x20] sm:$0xf]
      %v247 = vld [vmem:[%s1 + $0x24] sm:$0xf]
      %v248 = vld [vmem:[%s1 + $0x28] sm:$0xf]
      %v249 = vld [vmem:[%s1 + $0x2c] sm:$0xf]
      %v250 = vld [vmem:[%s1 + $0x30] sm:$0xf]
      %v251 = vld [vmem:[%s1 + $0x34] sm:$0xf]
      %v252 = vld [vmem:[%s1 + $0x38] sm:$0xf]
      %v253 = vld [vmem:[%s1 + $0x3c] sm:$0xf]
      %v254 = vld [vmem:[%s1 + $0x40] sm:$0xf]
      %v255 = vld [vmem:[%s1 + $0x44] sm:$0xf]
      %v256 = vld [vmem:[%s1 + $0x48] sm:$0xf]
      %v257 = vld [vmem:[%s1 + $0x4c] sm:$0xf]
      %v258 = vld [vmem:[%s1 + $0x50] sm:$0xf]
      %v259 = vld [vmem:[%s1 + $0x54] sm:$0xf]
      %v260 = vld [vmem:[%s1 + $0x58] sm:$0xf]
      %v261 = vld [vmem:[%s1 + $0x5c] sm:$0xf]
      %v262 = vld [vmem:[%s1 + $0x60] sm:$0xf]
      %v263 = vld [vmem:[%s1 + $0x64] sm:$0xf]
      %v264 = vld [vmem:[%s1 + $0x68] sm:$0xf]
      %v265 = vld [vmem:[%s1 + $0x6c] sm:$0xf]
      %v266 = vld [vmem:[%s1 + $0x70] sm:$0xf]
      %v267 = vld [vmem:[%s1 + $0x74] sm:$0xf]
      %v268 = vld [vmem:[%s1 + $0x78] sm:$0xf]
      %v269 = vld [vmem:[%s1 + $0x7c] sm:$0xf]
      %v270 = vld [vmem:[%s1 + $0x80] sm:$0xf]
      %v271 = vld [vmem:[%s1 + $0x84] sm:$0xf]
      %v272 = vld [vmem:[%s1 + $0x88] sm:$0xf]
      %v273 = vld [vmem:[%s1 + $0x8c] sm:$0xf]
      %v274 = vld [vmem:[%s1 + $0x90] sm:$0xf]
      %v275 = vld [vmem:[%s1 + $0x94] sm:$0xf]
      %v276 = vld [vmem:[%s1 + $0x98] sm:$0xf]
      %v277 = vld [vmem:[%s1 + $0x9c] sm:$0xf]
      %v278 = vld [vmem:[%s1 + $0xa0] sm:$0xf]
      %v279 = vld [vmem:[%s1 + $0xa4] sm:$0xf]
      %v280 = vld [vmem:[%s1 + $0xa8] sm:$0xf]
      %v281 = vld [vmem:[%s1 + $0xac] sm:$0xf]
      %v282 = vld [vmem:[%s1 + $0xb0] sm:$0xf]
      %v283 = vld [vmem:[%s1 + $0xb4] sm:$0xf]
      %v284 = vld [vmem:[%s1 + $0xb8] sm:$0xf]
      %v285 = vld [vmem:[%s1 + $0xbc] sm:$0xf]
      %v286 = vld [vmem:[%s1 + $0xc0] sm:$0xf]
      %v287 = vld [vmem:[%s1 + $0xc4] sm:$0xf]
      %v288 = vld [vmem:[%s1 + $0xc8] sm:$0xf]
      %v289 = vld [vmem:[%s1 + $0xcc] sm:$0xf]
      %v290 = vld [vmem:[%s1 + $0xd0] sm:$0xf]
      %v291 = vld [vmem:[%s1 + $0xd4] sm:$0xf]
      %v292 = vld [vmem:[%s1 + $0xd8] sm:$0xf]
      %v293 = vld [vmem:[%s1 + $0xdc] sm:$0xf]
      %v294 = vld [vmem:[%s1 + $0xe0] sm:$0xf]
      %v295 = vld [vmem:[%s1 + $0xe4] sm:$0xf]
      %v296 = vld [vmem:[%s1 + $0xe8] sm:$0xf]
      %v297 = vld [vmem:[%s1 + $0xec] sm:$0xf]
      %v298 = vld [vmem:[%s1 + $0xf0] sm:$0xf]
      %v299 = vld [vmem:[%s1 + $0xf4] sm:$0xf]
      %v300 = vld [vmem:[%s1 + $0xf8] sm:$0xf]
      %v301 = vld [vmem:[%s1 + $0xfc] sm:$0xf]
      %v302 = vld [vmem:[%s1 + $0x100] sm:$0xf]
      %v303 = vld [vmem:[%s1 + $0x104] sm:$0xf]
      %v304 = vld [vmem:[%s1 + $0x108] sm:$0xf]
      %v305 = vld [vmem:[%s1 + $0x10c] sm:$0xf]
      %v306 = vld [vmem:[%s1 + $0x110] sm:$0xf]
      %v307 = vld [vmem:[%s1 + $0x114] sm:$0xf]
      %v308 = vld [vmem:[%s1 + $0x118] sm:$0xf]
      %v309 = vld [vmem:[%s1 + $0x11c] sm:$0xf]
      %v310 = vld [vmem:[%s1 + $0x120] sm:$0xf]
      %v311 = vld [vmem:[%s1 + $0x124] sm:$0xf]
      %v312 = vld [vmem:[%s1 + $0x128] sm:$0xf]
      %v313 = vld [vmem:[%s1 + $0x12c] sm:$0xf]
      %v314 = vld [vmem:[%s1 + $0x130] sm:$0xf]
      %v315 = vld [vmem:[%s1 + $0x134] sm:$0xf]
      %v316 = vld [vmem:[%s1 + $0x138] sm:$0xf]
      %v317 = vld [vmem:[%s1 + $0x13c] sm:$0xf]
      %v318 = vld [vmem:[%s1 + $0x140] sm:$0xf]
      %v319 = vld [vmem:[%s1 + $0x144] sm:$0xf]
      %v320 = vld [vmem:[%s1 + $0x148] sm:$0xf]
      %v321 = vld [vmem:[%s1 + $0x14c] sm:$0xf]
      %v322 = vld [vmem:[%s1 + $0x150] sm:$0xf]
      %v323 = vld [vmem:[%s1 + $0x154] sm:$0xf]
      %v324 = vld [vmem:[%s1 + $0x158] sm:$0xf]
      %v325 = vld [vmem:[%s1 + $0x15c] sm:$0xf]
      %v326 = vld [vmem:[%s1 + $0x160] sm:$0xf]
      %v327 = vld [vmem:[%s1 + $0x164] sm:$0xf]
      %v328 = vld [vmem:[%s1 + $0x168] sm:$0xf]
      %v329 = vld [vmem:[%s1 + $0x16c] sm:$0xf]
      %v330 = vld [vmem:[%s1 + $0x170] sm:$0xf]
      %v331 = vld [vmem:[%s1 + $0x174] sm:$0xf]
      %v332 = vld [vmem:[%s1 + $0x178] sm:$0xf]
      %v333 = vld [vmem:[%s1 + $0x17c] sm:$0xf]
      %v334 = vld [vmem:[%s1 + $0x180] sm:$0xf]
      %v335 = vld [vmem:[%s1 + $0x184] sm:$0xf]
      %v336 = vld [vmem:[%s2] sm:$0x1]
      %v338 = vperm.slane %v336, 0
      %v438 = vunpack.c.l.b16 %v238
      %v439 = vunpack.c.l.b16 %v239
      %v440 = vunpack.c.l.b16 %v240
      %v441 = vunpack.c.l.b16 %v241
      %v442 = vunpack.c.l.b16 %v242
      %v443 = vunpack.c.l.b16 %v243
      %v444 = vunpack.c.l.b16 %v244
      %v445 = vunpack.c.l.b16 %v245
      %v446 = vunpack.c.l.b16 %v246
      %v447 = vunpack.c.l.b16 %v247
      %v448 = vunpack.c.l.b16 %v248
      %v449 = vunpack.c.l.b16 %v249
      %v450 = vunpack.c.l.b16 %v250
      %v451 = vunpack.c.l.b16 %v251
      %v452 = vunpack.c.l.b16 %v252
      %v453 = vunpack.c.l.b16 %v253
      %v454 = vunpack.c.l.b16 %v254
      %v455 = vunpack.c.l.b16 %v255
      %v456 = vunpack.c.l.b16 %v256
      %v457 = vunpack.c.l.b16 %v257
      %v458 = vunpack.c.l.b16 %v258
      %v459 = vunpack.c.l.b16 %v259
      %v460 = vunpack.c.l.b16 %v260
      %v461 = vunpack.c.l.b16 %v261
      %v462 = vunpack.c.l.b16 %v262
      %v463 = vunpack.c.l.b16 %v263
      %v464 = vunpack.c.l.b16 %v264
      %v465 = vunpack.c.l.b16 %v265
      %v466 = vunpack.c.l.b16 %v266
      %v467 = vunpack.c.l.b16 %v267
      %v468 = vunpack.c.l.b16 %v268
      %v469 = vunpack.c.l.b16 %v269
      %v470 = vunpack.c.l.b16 %v270
      %v471 = vunpack.c.l.b16 %v271
      %v472 = vunpack.c.l.b16 %v272
      %v473 = vunpack.c.l.b16 %v273
      %v474 = vunpack.c.l.b16 %v274
      %v475 = vunpack.c.l.b16 %v275
      %v476 = vunpack.c.l.b16 %v276
      %v477 = vunpack.c.l.b16 %v277
      %v478 = vunpack.c.l.b16 %v278
      %v479 = vunpack.c.l.b16 %v279
      %v480 = vunpack.c.l.b16 %v280
      %v481 = vunpack.c.l.b16 %v281
      %v482 = vunpack.c.l.b16 %v282
      %v483 = vunpack.c.l.b16 %v283
      %v484 = vunpack.c.l.b16 %v284
      %v485 = vunpack.c.l.b16 %v285
      %v486 = vunpack.c.l.b16 %v286
      %v487 = vunpack.c.l.b16 %v287
      %v488 = vunpack.c.l.b16 %v288
      %v489 = vunpack.c.l.b16 %v289
      %v490 = vunpack.c.l.b16 %v290
      %v491 = vunpack.c.l.b16 %v291
      %v492 = vunpack.c.l.b16 %v292
      %v493 = vunpack.c.l.b16 %v293
      %v494 = vunpack.c.l.b16 %v294
      %v495 = vunpack.c.l.b16 %v295
      %v496 = vunpack.c.l.b16 %v296
      %v497 = vunpack.c.l.b16 %v297
      %v498 = vunpack.c.l.b16 %v298
      %v499 = vunpack.c.l.b16 %v299
      %v500 = vunpack.c.l.b16 %v300
      %v501 = vunpack.c.l.b16 %v301
      %v502 = vunpack.c.l.b16 %v302
      %v503 = vunpack.c.l.b16 %v303
      %v504 = vunpack.c.l.b16 %v304
      %v505 = vunpack.c.l.b16 %v305
      %v506 = vunpack.c.l.b16 %v306
      %v507 = vunpack.c.l.b16 %v307
      %v508 = vunpack.c.l.b16 %v308
      %v509 = vunpack.c.l.b16 %v309
      %v510 = vunpack.c.l.b16 %v310
      %v511 = vunpack.c.l.b16 %v311
      %v512 = vunpack.c.l.b16 %v312
      %v513 = vunpack.c.l.b16 %v313
      %v514 = vunpack.c.l.b16 %v314
      %v515 = vunpack.c.l.b16 %v315
      %v516 = vunpack.c.l.b16 %v316
      %v517 = vunpack.c.l.b16 %v317
      %v518 = vunpack.c.l.b16 %v318
      %v519 = vunpack.c.l.b16 %v319
      %v520 = vunpack.c.l.b16 %v320
      %v521 = vunpack.c.l.b16 %v321
      %v522 = vunpack.c.l.b16 %v322
      %v523 = vunpack.c.l.b16 %v323
      %v524 = vunpack.c.l.b16 %v324
      %v525 = vunpack.c.l.b16 %v325
      %v526 = vunpack.c.l.b16 %v326
      %v527 = vunpack.c.l.b16 %v327
      %v528 = vunpack.c.l.b16 %v328
      %v529 = vunpack.c.l.b16 %v329
      %v530 = vunpack.c.l.b16 %v330
      %v531 = vunpack.c.l.b16 %v331
      %v532 = vunpack.c.l.b16 %v332
      %v533 = vunpack.c.l.b16 %v333
      %v534 = vunpack.c.l.b16 %v334
      %v535 = vunpack.c.l.b16 %v335
      %v536 = vpack.c.b16 %v439, %v438
      %v537 = vpack.c.b16 %v441, %v440
      %v538 = vpack.c.b16 %v443, %v442
      %v539 = vpack.c.b16 %v445, %v444
      %v540 = vpack.c.b16 %v447, %v446
      %v541 = vpack.c.b16 %v449, %v448
      %v542 = vpack.c.b16 %v451, %v450
      %v543 = vpack.c.b16 %v453, %v452
      %v544 = vpack.c.b16 %v455, %v454
      %v545 = vpack.c.b16 %v457, %v456
      %v546 = vpack.c.b16 %v459, %v458
      %v547 = vpack.c.b16 %v461, %v460
      %v548 = vpack.c.b16 %v463, %v462
      %v549 = vpack.c.b16 %v465, %v464
      %v550 = vpack.c.b16 %v467, %v466
      %v551 = vpack.c.b16 %v469, %v468
      %v552 = vpack.c.b16 %v471, %v470
      %v553 = vpack.c.b16 %v473, %v472
      %v554 = vpack.c.b16 %v475, %v474
      %v555 = vpack.c.b16 %v477, %v476
      %v556 = vpack.c.b16 %v479, %v478
      %v557 = vpack.c.b16 %v481, %v480
      %v558 = vpack.c.b16 %v483, %v482
      %v559 = vpack.c.b16 %v485, %v484
      %v560 = vpack.c.b16 %v487, %v486
      %v561 = vpack.c.b16 %v489, %v488
      %v562 = vpack.c.b16 %v491, %v490
      %v563 = vpack.c.b16 %v493, %v492
      %v564 = vpack.c.b16 %v495, %v494
      %v565 = vpack.c.b16 %v497, %v496
      %v566 = vpack.c.b16 %v499, %v498
      %v567 = vpack.c.b16 %v501, %v500
      %v568 = vpack.c.b16 %v503, %v502
      %v569 = vpack.c.b16 %v505, %v504
      %v570 = vpack.c.b16 %v507, %v506
      %v571 = vpack.c.b16 %v509, %v508
      %v572 = vpack.c.b16 %v511, %v510
      %v573 = vpack.c.b16 %v513, %v512
      %v574 = vpack.c.b16 %v515, %v514
      %v575 = vpack.c.b16 %v517, %v516
      %v576 = vpack.c.b16 %v519, %v518
      %v577 = vpack.c.b16 %v521, %v520
      %v578 = vpack.c.b16 %v523, %v522
      %v579 = vpack.c.b16 %v525, %v524
      %v580 = vpack.c.b16 %v527, %v526
      %v581 = vpack.c.b16 %v529, %v528
      %v582 = vpack.c.b16 %v531, %v530
      %v583 = vpack.c.b16 %v533, %v532
      %v584 = vpack.c.b16 %v535, %v534
      %vm634 = vcmask 130048
      %v636 = vsel %vm634, %v237, 0
      %638 = vmatpush.bf16.msra.mxu0 %v543
      %639 = vmatpush.bf16.msra.mxu0 %v542
      %640 = vmatpush.bf16.msra.mxu0 %v541
      %641 = vmatpush.bf16.msra.mxu0 %v540
      %642 = vmatpush.bf16.msra.mxu0 %v539
      %643 = vmatpush.bf16.msra.mxu0 %v538
      %644 = vmatpush.bf16.msra.mxu0 %v537
      %645 = vmatpush.bf16.msra.mxu0 %v536
      %646 = vmatmul.bf16.gmra.mxu0 %v231
      %v647 = vpop.f32.mrf.mxu0
      %v648 = vadd.f32 %v338, %v647
      %v649 = vpop.f32.mrf.mxu0
      %650 = vdwg.mxu0
      %651 = vmatpush.bf16.msra.mxu0 %v551
      %652 = vmatpush.bf16.msra.mxu0 %v550
      %653 = vmatpush.bf16.msra.mxu0 %v549
      %654 = vmatpush.bf16.msra.mxu0 %v548
      %655 = vmatpush.bf16.msra.mxu0 %v547
      %656 = vmatpush.bf16.msra.mxu0 %v546
      %657 = vmatpush.bf16.msra.mxu0 %v545
      %658 = vmatpush.bf16.msra.mxu0 %v544
      %659 = vmatmul.bf16.gmra.mxu0 %v232
      %v660 = vpop.f32.mrf.mxu0
      %v661 = vadd.f32 %v648, %v660
      %v662 = vpop.f32.mrf.mxu0
      %663 = vdwg.mxu0
      %664 = vmatpush.bf16.msra.mxu0 %v559
      %665 = vmatpush.bf16.msra.mxu0 %v558
      %666 = vmatpush.bf16.msra.mxu0 %v557
      %667 = vmatpush.bf16.msra.mxu0 %v556
      %668 = vmatpush.bf16.msra.mxu0 %v555
      %669 = vmatpush.bf16.msra.mxu0 %v554
      %670 = vmatpush.bf16.msra.mxu0 %v553
      %671 = vmatpush.bf16.msra.mxu0 %v552
      %672 = vmatmul.bf16.gmra.mxu0 %v233
      %v673 = vpop.f32.mrf.mxu0
      %v674 = vadd.f32 %v661, %v673
      %v675 = vpop.f32.mrf.mxu0
      %676 = vdwg.mxu0
      %677 = vmatpush.bf16.msra.mxu0 %v567
      %678 = vmatpush.bf16.msra.mxu0 %v566
      %679 = vmatpush.bf16.msra.mxu0 %v565
      %680 = vmatpush.bf16.msra.mxu0 %v564
      %681 = vmatpush.bf16.msra.mxu0 %v563
      %682 = vmatpush.bf16.msra.mxu0 %v562
      %683 = vmatpush.bf16.msra.mxu0 %v561
      %684 = vmatpush.bf16.msra.mxu0 %v560
      %685 = vmatmul.bf16.gmra.mxu0 %v234
      %v686 = vpop.f32.mrf.mxu0
      %v687 = vadd.f32 %v674, %v686
      %v688 = vpop.f32.mrf.mxu0
      %689 = vdwg.mxu0
      %690 = vmatpush.bf16.msra.mxu0 %v575
      %691 = vmatpush.bf16.msra.mxu0 %v574
      %692 = vmatpush.bf16.msra.mxu0 %v573
      %693 = vmatpush.bf16.msra.mxu0 %v572
      %694 = vmatpush.bf16.msra.mxu0 %v571
      %695 = vmatpush.bf16.msra.mxu0 %v570
      %696 = vmatpush.bf16.msra.mxu0 %v569
      %697 = vmatpush.bf16.msra.mxu0 %v568
      %698 = vmatmul.bf16.gmra.mxu0 %v235
      %v699 = vpop.f32.mrf.mxu0
      %v700 = vadd.f32 %v687, %v699
      %v701 = vpop.f32.mrf.mxu0
      %702 = vdwg.mxu0
      %703 = vmatpush.bf16.msra.mxu0 %v583
      %704 = vmatpush.bf16.msra.mxu0 %v582
      %705 = vmatpush.bf16.msra.mxu0 %v581
      %706 = vmatpush.bf16.msra.mxu0 %v580
      %707 = vmatpush.bf16.msra.mxu0 %v579
      %708 = vmatpush.bf16.msra.mxu0 %v578
      %709 = vmatpush.bf16.msra.mxu0 %v577
      %710 = vmatpush.bf16.msra.mxu0 %v576
      %711 = vmatmul.bf16.gmra.mxu0 %v236
      %v712 = vpop.f32.mrf.mxu0
      %v713 = vadd.f32 %v700, %v712
      %v714 = vpop.f32.mrf.mxu0
      %715 = vdwg.mxu0
      %716 = vmatpush.bf16.msra.mxu0 0
      %717 = vmatpush.bf16.msra.mxu0 0
      %718 = vmatpush.bf16.msra.mxu0 0
      %719 = vmatpush.bf16.msra.mxu0 0
      %720 = vmatpush.bf16.msra.mxu0 0
      %721 = vmatpush.bf16.msra.mxu0 0
      %722 = vmatpush.bf16.msra.mxu0 0
      %723 = vmatpush.bf16.msra.mxu0 %v584
      %724 = vmatmul.bf16.gmra.mxu0 %v636
      %v725 = vpop.f32.mrf.mxu0
      %v726 = vadd.f32 %v713, %v725
      %v727 = vpop.f32.mrf.mxu0
      %728 = vdwg.mxu0
      %v729 = vmax.f32 %v726, 0.0
      %v730 = vpack.c.bf16 %v729, %v729
      %v731 = vld [vmem:[%s3] sm:$0xf]
      %v732 = vld [vmem:[%s3 + $0x4] sm:$0xf]
      %v733 = vld [vmem:[%s3 + $0x8] sm:$0xf]
      %v734 = vld [vmem:[%s3 + $0xc] sm:$0xf]
      %v735 = vld [vmem:[%s3 + $0x10] sm:$0xf]
      %v736 = vld [vmem:[%s3 + $0x14] sm:$0xf]
      %v737 = vld [vmem:[%s3 + $0x18] sm:$0xf]
      %v738 = vld [vmem:[%s3 + $0x1c] sm:$0xf]
      %v739 = vld [vmem:[%s4] sm:$0x1]
      %v741 = vperm.slane %v739, 0
      %v751 = vunpack.c.l.b16 %v731
      %v752 = vunpack.c.l.b16 %v732
      %v753 = vunpack.c.l.b16 %v733
      %v754 = vunpack.c.l.b16 %v734
      %v755 = vunpack.c.l.b16 %v735
      %v756 = vunpack.c.l.b16 %v736
      %v757 = vunpack.c.l.b16 %v737
      %v758 = vunpack.c.l.b16 %v738
      %v759 = vpack.c.b16 %v752, %v751
      %v760 = vpack.c.b16 %v754, %v753
      %v761 = vpack.c.b16 %v756, %v755
      %v762 = vpack.c.b16 %v758, %v757
      %vm767 = vcmask 523264
      %v769 = vsel %vm767, %v730, 0
      %771 = vmatpush.bf16.msra.mxu0 0
      %772 = vmatpush.bf16.msra.mxu0 0
      %773 = vmatpush.bf16.msra.mxu0 0
      %774 = vmatpush.bf16.msra.mxu0 0
      %775 = vmatpush.bf16.msra.mxu0 %v762
      %776 = vmatpush.bf16.msra.mxu0 %v761
      %777 = vmatpush.bf16.msra.mxu0 %v760
      %778 = vmatpush.bf16.msra.mxu0 %v759
      %779 = vmatmul.bf16.gmra.mxu0 %v769
      %v780 = vpop.f32.mrf.mxu0
      %v781 = vadd.f32 %v741, %v780
      %v782 = vpop.f32.mrf.mxu0
      %783 = vdwg.mxu0
      %vm784 = vcmask 64512
      %785 = vst.msk [vmem:[%s222] sm:$0xff] %vm784, %v781
      %p786 = scmp.lt.s32.totalorder %s16, 1
      %s787 = scalar_select %p786, %s16, 1
      %s788 = smul.addr %s787, 8
      %s789 = scalar_lea.vmem %s5, %s788
      // Predicated region
      $region41: #{tpu_custom_call.1} parent=39 // pred_check
        %p790 = pneg %p144
      $region42: #{tpu_custom_call.1} parent=39 // pred_check_branch
        %792 = sbr.rel (%p790) target = $region44
      $region43: #{tpu_custom_call.1} parent=39 // pred_region
        _
      $region44: #{tpu_custom_call.1} parent=39 // pred_fallthru
        _
    $region40: #{tpu_custom_call.1} parent=5 // pred_fallthru
      _
    %p793 = scmp.le.s32.totalorder 2, %s11
    // Predicated region
    $region45: #{tpu_custom_call.1} parent=5 // pred_check
      %p794 = pneg %p793
    $region46: #{tpu_custom_call.1} parent=5 // pred_check_branch
      %796 = sbr.rel (%p794) target = $region48
    $region47: #{tpu_custom_call.1} parent=5 // pred_region
      %s797 = ssub.s32 %s11, 2
      // Predicated region
      $region49: #{tpu_custom_call.1} parent=47 // pred_check
        %p798 = pneg %p150
      $region50: #{tpu_custom_call.1} parent=47 // pred_check_branch
        %800 = sbr.rel (%p798) target = $region52
      $region51: #{tpu_custom_call.1} parent=47 // pred_region
        %p801 = scmp.lt.s32.totalorder %s17, 1
        %s802 = scalar_select %p801, %s17, 1
        %s803 = smul.addr %s802, 8
        %s804 = scalar_lea.vmem %s5, %s803
      $region52: #{tpu_custom_call.1} parent=47 // pred_fallthru
        _
    $region48: #{tpu_custom_call.1} parent=5 // pred_fallthru
      _
  $region6: #{tpu_custom_call.1} parent=0 // loop_footer
    %s15 = sadd.s32 1, %s11
  $region7: #{tpu_custom_call.1} parent=0 // loop_footer_branch
    %10 = sbr.rel target = $region3
  $region8: #{tpu_custom_call.1} parent=0 // loop_exit
    _

</llo_original>
